<compile_context>
chip_gen: v7x
topology: tpu7x:2x2x1
jax: 0.10.0
libtpu: 0.0.40
codegen_flags: <defaults>
</compile_context>

<pallas_src>
from functools import lru_cache

import jax
import jax.numpy as jnp
from jax.experimental import pallas as pl
from jax.experimental.pallas import tpu as pltpu

K = 3       # Conv2d kernel size from the module definition
LANE = 128  # TPU lane width


@lru_cache(maxsize=None)
def _roll_matches_np():
    """True iff pltpu.roll follows np.roll semantics (out[i] = in[(i - s) % n]).

    One tiny probe kernel, run once per process, so the kw-shift direction is
    robust to the rotate convention of the lowering.
    """
    def probe(x_ref, o_ref):
        o_ref[...] = pltpu.roll(x_ref[...], 1, axis=0)

    with jax.ensure_compile_time_eval():
        x = jnp.arange(8 * 128, dtype=jnp.int32).reshape(8, 128)
        out = pl.pallas_call(
            probe, out_shape=jax.ShapeDtypeStruct((8, 128), jnp.int32))(x)
        return bool(out[0, 0] == x[7, 0])


def _make_conv_kernel(H, W, roll_like_np):
    H_OUT = H - K + 1

    # Shift amount such that rolled[:, w, :] == x[:, w + kw, :] (mod W).
    def _shift(kw):
        return (W - kw) % W if roll_like_np else kw

    def conv2d_kernel(x_ref, w_ref, b_ref, o_ref):
        # x_ref: (H, W, LN) VMEM   w_ref: (9,) SMEM   b_ref: (1,) SMEM
        # o_ref: (H_OUT, W, LN) VMEM; LN is a multiple of 128.
        #
        # Tap shifts:
        #   kh -> slice along the leading H axis (pure address offset, free)
        #   kw -> pltpu.roll along the sublane W axis (XLU slot); keeps every
        #         load/store (8,128)-aligned, no masked vst / re-layout copies.
        # The last K-1 output columns contain roll wraparound garbage and are
        # trimmed by the wrapper (storing full W keeps the store dense).
        x = x_ref[...]
        x_shift = [x] + [pltpu.roll(x, _shift(kw), axis=1) for kw in range(1, K)]

        acc = x_shift[0][0:H_OUT, :, :] * w_ref[0]          # tap (0, 0)
        for kh in range(K):
            for kw in range(K):
                if kh == 0 and kw == 0:
                    continue
                acc = acc + x_shift[kw][kh:kh + H_OUT, :, :] * w_ref[kh * K + kw]
        o_ref[...] = acc + b_ref[0]

    return conv2d_kernel, H_OUT


def _tpu_vmem_and_cores():
    """(VMEM capacity bytes, TensorCores per chip); conservative fallbacks."""
    vmem_cap, cores = 64 << 20, 1          # v7x-safe defaults
    try:
        info = pltpu.get_tpu_info()
        vmem_cap = int(getattr(info, "vmem_capacity_bytes", vmem_cap))
        for name in ("tensorcores_per_chip", "num_tensorcores", "num_cores",
                     "core_count"):
            c = getattr(info, name, None)
            if isinstance(c, int) and c > 0:
                cores = c
                break
    except Exception:
        pass
    return vmem_cap, cores


def _per_lane_vmem_bytes(H, W, H_OUT):
    # Per lane of the lane block (f32 bytes):
    #   2x double-buffered input block + x and its two rolled copies (3x)
    # + 2x double-buffered output block + 1x accumulator.
    return 4 * ((2 + 3) * H * W + (2 + 1) * H_OUT * W)


def _pick_lane_block(H, W, H_OUT, N, vmem_budget, num_cores):
    """Lanes per grid step, sized to the generation's VMEM and core count."""
    per_lane = _per_lane_vmem_bytes(H, W, H_OUT)
    max_mult_vmem = max(1, vmem_budget // (per_lane * LANE))
    n_tiles = pl.cdiv(N, LANE)
    if num_cores > 1 and n_tiles >= num_cores:
        # Keep >= num_cores grid steps so every TensorCore gets work (v7x).
        max_mult_grid = max(1, n_tiles // num_cores)
    else:
        # Single-TC parts (v5e/v6e) or a single lane tile: one block as big as
        # VMEM allows (fewer per-step overheads, better DMA efficiency).
        max_mult_grid = n_tiles
    return LANE * max(1, min(max_mult_vmem, max_mult_grid, n_tiles))


def conv2d_hwn(x_hwn, weight, bias):
    """Conv2d(1, 1, 3) on an (H, W, N) f32 slab (batch in the lane axis).

    Fast path: callers that keep activations in (H, W, N) layout pay no HBM
    relayout at all.  Returns (H_OUT, W_OUT, N) f32.
    """
    H, W, N = x_hwn.shape
    assert H >= K and W >= K, "valid 3x3 conv needs H, W >= 3"
    W_OUT = W - K + 1
    kernel, H_OUT = _make_conv_kernel(H, W, _roll_matches_np())

    vmem_cap, num_cores = _tpu_vmem_and_cores()
    # ~42 MiB staging budget on 128 MiB parts (v5e/v6e), ~21 MiB on v7x.
    vmem_budget = min(vmem_cap // 3, 48 << 20)
    lane_block = _pick_lane_block(H, W, H_OUT, N, vmem_budget, num_cores)
    if _per_lane_vmem_bytes(H, W, H_OUT) * lane_block > vmem_budget:
        # TODO(synk): add H-row tiling with a 2-row halo (Element-indexed
        # leading dim or manual DMA) for images too large for a single slab.
        raise ValueError(f"H x W = {H}x{W} too large for single-slab tiling")

    n_pad = pl.cdiv(N, lane_block) * lane_block
    if n_pad != N:
        # TODO(synk): for N << 128 the lane padding wastes DMA/compute; pack
        # (N x a spatial dim) into the lane axis if small batch is the hot path.
        x_hwn = jnp.pad(x_hwn, ((0, 0), (0, 0), (0, n_pad - N)))

    w_flat = weight.reshape(K * K).astype(jnp.float32)   # (9,) in SMEM
    b_flat = bias.reshape(1).astype(jnp.float32)         # (1,) in SMEM

    out_hwn = pl.pallas_call(
        kernel,
        out_shape=jax.ShapeDtypeStruct((H_OUT, W, n_pad), jnp.float32),
        grid_spec=pltpu.PrefetchScalarGridSpec(
            num_scalar_prefetch=0,
            grid=(n_pad // lane_block,),
            in_specs=[
                pl.BlockSpec((H, W, lane_block), lambda n: (0, 0, n)),
                pl.BlockSpec(memory_space=pltpu.MemorySpace.SMEM),
                pl.BlockSpec(memory_space=pltpu.MemorySpace.SMEM),
            ],
            out_specs=pl.BlockSpec((H_OUT, W, lane_block), lambda n: (0, 0, n)),
        ),
        compiler_params=pltpu.CompilerParams(
            dimension_semantics=("parallel",),
            vmem_limit_bytes=int(min(vmem_cap * 3 // 4, 96 << 20)),
        ),
    )(x_hwn, w_flat, b_flat)

    # Drop the K-1 wraparound columns and any batch padding (cheap slice; XLA
    # fuses it into whatever consumes the result).
    # TODO(synk): on v7x with a single lane tile, split H_OUT across the two
    # TensorCores (CORE_PARALLEL / core_map) instead of running on one TC.
    return out_hwn[:, :W_OUT, :N]


def conv2d_1x1ch_3x3(x_nchw, weight, bias):
    """torch-layout adapter: x (N, 1, H, W) f32 -> (N, 1, H-2, W-2) f32.

    The transposes to/from the (H, W, N) compute layout are full HBM
    round-trips; production callers should keep activations in (H, W, N) and
    call conv2d_hwn directly.
    """
    N, C, H, W = x_nchw.shape
    assert C == 1, "module is Conv2d(1, 1, 3)"
    x_hwn = jnp.transpose(x_nchw[:, 0, :, :], (1, 2, 0))
    out_hwn = conv2d_hwn(x_hwn, weight, bias)
    return jnp.transpose(out_hwn, (2, 0, 1))[:, None, :, :]


if __name__ == "__main__":
    key = jax.random.PRNGKey(0)
    k_x, k_w, k_b = jax.random.split(key, 3)

    # Small deterministic shapes consistent with the module: N=2, C=1, 16x16.
    N, H, W = 2, 16, 16
    x = jax.random.normal(k_x, (N, 1, H, W), dtype=jnp.float32)

    # Deterministic parameter init (PyTorch-style uniform bound 1/sqrt(fan_in)).
    fan_in = 1 * K * K
    bound = 1.0 / (fan_in ** 0.5)
    weight = jax.random.uniform(k_w, (1, 1, K, K), jnp.float32, -bound, bound)
    bias = jax.random.uniform(k_b, (1,), jnp.float32, -bound, bound)

    out = jax.block_until_ready(conv2d_1x1ch_3x3(x, weight, bias))

    # Cross-check against XLA's conv (valid padding, cross-correlation like
    # torch.nn.Conv2d).
    ref = jax.lax.conv_general_dilated(
        x, weight, window_strides=(1, 1), padding="VALID",
        dimension_numbers=("NCHW", "OIHW", "NCHW")) + bias[None, :, None, None]
    assert out.shape == (N, 1, H - K + 1, W - K + 1)
    assert jnp.allclose(out, ref, rtol=1e-5, atol=1e-5)

    print("KERNEL_OK")
</pallas_src>

<mosaic_0001>
module attributes {stable_mosaic.version = 11 : i64} {
  func.func @probe(%arg0: memref<8x128xi32, #tpu.memory_space<vmem>>, %arg1: memref<8x128xi32, #tpu.memory_space<vmem>>) attributes {dimension_semantics = [], scalar_prefetch = 0 : i64, scratch_operands = 0 : i64, tpu.core_type = #tpu.core_type<tc>} {
    %c0 = arith.constant 0 : index
    %c0_0 = arith.constant 0 : index
    %0 = vector.load %arg0[%c0, %c0_0] : memref<8x128xi32, #tpu.memory_space<vmem>>, vector<8x128xi32>
    %c1_i32 = arith.constant 1 : i32
    %1 = tpu.dynamic_rotate %0 by %c1_i32 dim 0 : vector<8x128xi32>, i32 -> vector<8x128xi32>
    %c0_1 = arith.constant 0 : index
    %c0_2 = arith.constant 0 : index
    %2 = vector.load %arg1[%c0_1, %c0_2] : memref<8x128xi32, #tpu.memory_space<vmem>>, vector<8x128xi32>
    tpu.vector_store %arg1[%c0_1, %c0_2], %1 {strides = array<i32>} : memref<8x128xi32, #tpu.memory_space<vmem>>, vector<8x128xi32>,
    return
  }
}

</mosaic_0001>

<llo_original>
// kernel: tpu_custom_call.1
$region0: #{tpu_custom_call.1}
  #allocation0 [shape = 'u32[]', space=smem, size = 0x4, offset = 0x4, fixed_abs, tag = 'smem constant byte address 0x4 - core index']
  #allocation1 [shape = 'u32[144,128]{1,0:T(1,128)}', space=vmem, size = 0x12000, scoped, tag = 'internal scratch']
  %s0 = inlined_call_operand.hbm [shape: s32[8,128], index: 0, kind: input, shape index: {}]
  %s1 = inlined_call_operand.hbm [shape: s32[8,128], index: 1, kind: output, shape index: {}]
  %s2 = sld [smem:[#allocation0]]
  $region18: #{tpu_custom_call.1} parent=0
    _
  %s4 = ssub.s32 1, %s2
  %s5 = scalar_select 0, %s4, %s2
  $region1: #{tpu_custom_call.1} parent=0
    #allocation2 [shape = 'u8[4096]{0}', space=vmem, size = 0x1000, scoped, tag = 'input window, operand 0, single buffered']
    #allocation3 [shape = 's32[1]{0}', space=sflag, size = 0x4, scoped, tag = 'scoped memory for tpu_custom_call.1']
    #allocation4 [shape = 's32[1]{0}', space=sflag, size = 0x4, scoped, tag = 'scoped memory for tpu_custom_call.1']
    #allocation5 [shape = 'u8[4096]{0}', space=vmem, size = 0x1000, scoped, tag = 'output window, operand 0, single buffered']
    %6 = vsyncpa [#allocation3], 0
    %7 = vsyncpa [#allocation4], 0
    // Predicated region
    $region2: #{tpu_custom_call.1} parent=1 // pred_check
      _
    $region3: #{tpu_custom_call.1} parent=1 // pred_check_branch
      %9 = sbr.rel (0) target = $region5
    $region4: #{tpu_custom_call.1} parent=1 // pred_region
      %s11 = ssub.s32 128, 128
      %12 = vsyncadd [#allocation3], %s11
      %s14 = sshll.u32 [#allocation2], 4
      %s15 = int_to_ptr.vmem [resolvable:$true] %s14
      %17 = dma.hbm_to_vmem [thread:$0]  %s0, 128, %s15, [#allocation3]
    $region5: #{tpu_custom_call.1} parent=1 // pred_fallthru
      _
    // Predicated region
    $region6: #{tpu_custom_call.1} parent=1 // pred_check
      _
    $region7: #{tpu_custom_call.1} parent=1 // pred_check_branch
      %19 = sbr.rel (0) target = $region9
    $region8: #{tpu_custom_call.1} parent=1 // pred_region
      %20 = dma.done [#allocation3], 128
    $region9: #{tpu_custom_call.1} parent=1 // pred_fallthru
      _
    %v21 = vld [vmem:[#allocation2] sm:$0xff]
    %v22 = vrot.slane %v21, 7
    %23 = vst [vmem:[#allocation5] sm:$0xff] %v22
    // Predicated region
    $region10: #{tpu_custom_call.1} parent=1 // pred_check
      _
    $region11: #{tpu_custom_call.1} parent=1 // pred_check_branch
      %25 = sbr.rel (0) target = $region13
    $region12: #{tpu_custom_call.1} parent=1 // pred_region
      %s27 = ssub.s32 128, 128
      %28 = vsyncadd [#allocation4], %s27
      %s30 = sshll.u32 [#allocation5], 4
      %s31 = int_to_ptr.vmem [resolvable:$true] %s30
      %33 = dma.vmem_to_hbm [thread:$0]  %s31, 128, %s1, [#allocation4]
    $region13: #{tpu_custom_call.1} parent=1 // pred_fallthru
      _
    // Predicated region
    $region14: #{tpu_custom_call.1} parent=1 // pred_check
      _
    $region15: #{tpu_custom_call.1} parent=1 // pred_check_branch
      %35 = sbr.rel (0) target = $region17
    $region16: #{tpu_custom_call.1} parent=1 // pred_region
      %36 = dma.done [#allocation4], 128
    $region17: #{tpu_custom_call.1} parent=1 // pred_fallthru
      _
    %37 = vsyncpa [#allocation3], 1
    %38 = vsyncpa [#allocation4], 1

</llo_original>
